<compile_context>
chip_gen: v5e
topology: v5e:2x2
jax: 0.10.0
libtpu: 0.0.40
codegen_flags: <defaults>
</compile_context>

<pallas_src>
import functools

import jax
import jax.numpy as jnp
from jax.experimental import pallas as pl
from jax.experimental.pallas import tpu as pltpu


_PIPELINE_BUF_BYTES = 16 * 1024 * 1024   # budget for 2 inputs x 2 pipeline bufs


def _dice_partials_kernel(pred_ref, target_ref, inter_ref, union_ref,
                          inter_acc, union_acc, *,
                          n_valid_lanes, chunk, chunks_per_split, need_mask,
                          approx):
    c = pl.program_id(2)          # sequential spatial chunk within this split
    nc = pl.num_programs(2)

    @pl.when(c == 0)
    def _init():
        inter_acc[...] = jnp.zeros_like(inter_acc)
        union_acc[...] = jnp.zeros_like(union_acc)

    # tile: (BN, CHUNK) — batch rows on sublanes, flattened spatial on lanes.
    x = pred_ref[...].astype(jnp.float32)
    t = target_ref[...].astype(jnp.float32)

    # logistic(x) = 1 / (1 + exp(-x)): exp (and, with approx=True, the
    # reciprocal) run on the otherwise-idle EUP slot; avoids the compare/select
    # VPU ops of jax.nn.sigmoid's numerically-stable lowering.
    p = pl.reciprocal(1.0 + jnp.exp(-x), approx=approx)

    if need_mask:
        # Global lane index of each element; zero out lanes past H*W (ragged
        # tail chunk, or fully-overhanging clamped chunks of the 2-way split).
        s = pl.program_id(0)
        gchunk = s * chunks_per_split + c
        lane = jax.lax.broadcasted_iota(jnp.int32, x.shape, 1)
        valid = (gchunk * chunk + lane) < n_valid_lanes
        p = jnp.where(valid, p, 0.0)
        t = jnp.where(valid, t, 0.0)

    # Per-row spatial partial sums (lane-axis reduce), accumulated over chunks.
    inter_acc[...] += jnp.sum(p * t, axis=-1, keepdims=True)
    union_acc[...] += (jnp.sum(p, axis=-1, keepdims=True)
                       + jnp.sum(t, axis=-1, keepdims=True))

    @pl.when(c == nc - 1)
    def _finalize():
        inter_ref[...] = jnp.broadcast_to(inter_acc[...], inter_ref.shape)
        union_ref[...] = jnp.broadcast_to(union_acc[...], union_ref.shape)


def dice_loss(pred, target, smooth=1e-5, *, reduction=False,
              approx_sigmoid=False, max_chunk_lanes=None):
    """Dice loss matching the PyTorch module's forward.

    pred: logits, [N, 1, H, W] (NCHW, C=1), [N, H, W] or [H, W].
    target: same shape, {0, 1}-valued (any dtype; upcast to f32 in-kernel).
    reduction=False (default) returns the scalar mean loss; True returns [loss].
    """
    if pred.shape != target.shape:
        raise ValueError("pred/target shape mismatch")

    # torch `.squeeze()` equivalent for the canonical NCHW C=1 case; axis-
    # specific so a size-1 batch / spatial dim is not accidentally dropped.
    if pred.ndim == 4 and pred.shape[1] == 1:
        pred = jnp.squeeze(pred, axis=1)
        target = jnp.squeeze(target, axis=1)
    if pred.ndim == 2:                      # single [H, W] image -> batch of 1
        pred = pred[None]
        target = target[None]
    assert pred.ndim == 3 and pred.shape == target.shape

    n, h, w = pred.shape
    l = h * w

    # 64-bit types are not supported in the TPU kernel path (module is f32
    # anyway); everything else is streamed in its native dtype (no HBM pass).
    if pred.dtype.itemsize > 4:
        pred = pred.astype(jnp.float32)
    if target.dtype.itemsize > 4:
        target = target.astype(jnp.float32)

    # Lane-dense [N, H*W] views — reshape only, no padding / extra HBM pass.
    pred_f = pred.reshape(n, l)
    targ_f = target.reshape(n, l)

    ip = pred_f.dtype.itemsize
    it = targ_f.dtype.itemsize

    # Sublane (batch) block matched to the narrowest dtype's packed tile:
    # 8 for f32, 16 for bf16, 32 for int8/bool.
    bn = max(8, 32 // min(ip, it))

    # Spatial chunk: as many lanes as fit the pipeline-buffer byte budget
    # (2 inputs x 2 buffers), capped at the (128-rounded) spatial size.
    chunk = _PIPELINE_BUF_BYTES // (2 * bn * (ip + it))
    chunk = max(128, (chunk // 128) * 128)
    if max_chunk_lanes is not None:
        chunk = min(chunk, max(128, (int(max_chunk_lanes) // 128) * 128))
    l128 = ((l + 127) // 128) * 128
    chunk = min(chunk, l128)

    total_chunks = pl.cdiv(l, chunk)
    batch_blocks = pl.cdiv(n, bn)

    # v7x has 2 TensorCores: if the batch collapses to a single block, split the
    # spatial reduction into 2 "parallel" super-chunks whose partials land in
    # distinct output rows and are combined in the wrapper.  Harmless
    # (sequential) on single-TC v5e / v6e.
    n_split = 2 if (batch_blocks < 2 and total_chunks >= 2) else 1
    chunks_per_split = pl.cdiv(total_chunks, n_split)

    need_mask = (total_chunks * chunk != l) or (
        n_split * chunks_per_split != total_chunks)

    def in_index(s, b, c):
        # Clamp so over-hanging (split, chunk) pairs re-read a valid block;
        # their contribution is zeroed by the in-kernel lane mask.
        return (b, jnp.minimum(s * chunks_per_split + c, total_chunks - 1))

    def out_index(s, b, c):
        return (s, b, 0)

    kernel = functools.partial(
        _dice_partials_kernel,
        n_valid_lanes=l, chunk=chunk, chunks_per_split=chunks_per_split,
        need_mask=need_mask, approx=bool(approx_sigmoid))

    pipeline_bytes = 2 * bn * chunk * (ip + it)
    vmem_limit = int(min(48 << 20, max(32 << 20, pipeline_bytes + (24 << 20))))

    inter, union = pl.pallas_call(
        kernel,
        out_shape=(
            jax.ShapeDtypeStruct((n_split, n, 128), jnp.float32),
            jax.ShapeDtypeStruct((n_split, n, 128), jnp.float32),
        ),
        grid_spec=pltpu.PrefetchScalarGridSpec(
            num_scalar_prefetch=0,
            grid=(n_split, batch_blocks, chunks_per_split),
            in_specs=[
                pl.BlockSpec((bn, chunk), in_index),
                pl.BlockSpec((bn, chunk), in_index),
            ],
            out_specs=[
                pl.BlockSpec((1, bn, 128), out_index),
                pl.BlockSpec((1, bn, 128), out_index),
            ],
            scratch_shapes=[
                pltpu.VMEM((bn, 1), jnp.float32),   # intersection accumulator
                pltpu.VMEM((bn, 1), jnp.float32),   # union accumulator
            ],
        ),
        compiler_params=pltpu.CompilerParams(
            dimension_semantics=("parallel", "parallel", "arbitrary"),
            vmem_limit_bytes=vmem_limit,
        ),
        cost_estimate=pl.CostEstimate(
            flops=int(6 * n * l),
            transcendentals=int(n * l),
            bytes_accessed=int(n * l * (ip + it) + 2 * n_split * n * 128 * 4),
        ),
    )(pred_f, targ_f)

    # Tiny finalization in plain JAX: combine split partials, apply smoothing,
    # per-batch dice, then the reduction.
    inter_b = inter[:, :, 0].sum(axis=0)        # (n,)
    union_b = union[:, :, 0].sum(axis=0)        # (n,)
    dice = 2.0 * (inter_b + smooth) / (union_b + smooth)
    loss = 1.0 - dice
    if reduction:
        return [loss]
    return loss.mean()


def _dice_loss_ref(pred, target, smooth=1e-5):
    pred = jnp.squeeze(pred).astype(jnp.float32)
    target = jnp.squeeze(target).astype(jnp.float32)
    pred = jax.nn.sigmoid(pred)
    intersection = (pred * target).sum(axis=-1).sum(axis=-1)
    union = (pred + target).sum(axis=-1).sum(axis=-1)
    dice = 2.0 * (intersection + smooth) / (union + smooth)
    return (1.0 - dice).mean()


def _check(name, got, want, atol, rtol):
    if not jnp.allclose(got, want, atol=atol, rtol=rtol):
        raise AssertionError(f"{name} mismatch: kernel={got} ref={want}")


if __name__ == "__main__":
    key = jax.random.PRNGKey(0)
    k1, k2, k3, k4, k5, k6 = jax.random.split(key, 6)

    # 1) Canonical NCHW, C=1 segmentation-logit shape.
    N, C, H, W = 2, 1, 16, 16
    pred = jax.random.normal(k1, (N, C, H, W), dtype=jnp.float32)
    target = (jax.random.uniform(k2, (N, C, H, W)) > 0.5).astype(jnp.float32)
    loss = jax.block_until_ready(dice_loss(pred, target))
    _check("base", loss, _dice_loss_ref(pred, target), atol=1e-5, rtol=1e-4)

    # 2) Ragged spatial size (H*W not a multiple of 128) and batch not a
    #    multiple of the sublane tile: exercises partial blocks + lane mask.
    pred2 = jax.random.normal(k3, (3, 1, 20, 20), dtype=jnp.float32)
    target2 = (jax.random.uniform(k4, (3, 1, 20, 20)) > 0.5).astype(jnp.float32)
    loss2 = jax.block_until_ready(dice_loss(pred2, target2))
    _check("ragged", loss2, _dice_loss_ref(pred2, target2), atol=1e-5, rtol=1e-4)

    # 3) Multi-chunk accumulation + 2-way parallel spatial split (forced small
    #    chunk so the split/clamp/mask path is exercised at a tiny size).
    pred3 = jax.random.normal(k5, (2, 1, 64, 40), dtype=jnp.float32)
    target3 = (jax.random.uniform(k6, (2, 1, 64, 40)) > 0.5).astype(jnp.float32)
    loss3 = jax.block_until_ready(dice_loss(pred3, target3, max_chunk_lanes=512))
    _check("split", loss3, _dice_loss_ref(pred3, target3), atol=1e-5, rtol=1e-4)

    # 4) Approximate EUP-reciprocal sigmoid path (v7x VPU-slot saver).
    loss4 = jax.block_until_ready(dice_loss(pred, target, approx_sigmoid=True))
    _check("approx", loss4, _dice_loss_ref(pred, target), atol=5e-3, rtol=5e-3)

    print("KERNEL_OK")
</pallas_src>

<mosaic_0001>
module attributes {stable_mosaic.version = 11 : i64} {
  func.func @_dice_partials_kernel(%arg0: i32, %arg1: i32, %arg2: i32, %arg3: memref<8x256xf32, #tpu.memory_space<vmem>>, %arg4: memref<8x256xf32, #tpu.memory_space<vmem>>, %arg5: memref<1x8x128xf32, #tpu.memory_space<vmem>>, %arg6: memref<1x8x128xf32, #tpu.memory_space<vmem>>, %arg7: memref<8x1xf32, #tpu.memory_space<vmem>>, %arg8: memref<8x1xf32, #tpu.memory_space<vmem>>) attributes {dimension_semantics = [#tpu.dimension_semantics<parallel>, #tpu.dimension_semantics<parallel>, #tpu.dimension_semantics<arbitrary>], iteration_bounds = array<i64: 1, 1, 1>, scalar_prefetch = 0 : i64, scratch_operands = 2 : i64, tpu.core_type = #tpu.core_type<tc>, window_params = [{transform_indices = @transform_0, window_bounds = array<i64: 8, 256>}, {transform_indices = @transform_1, window_bounds = array<i64: 8, 256>}, {transform_indices = @transform_2, window_bounds = array<i64: 1, 8, 128>}, {transform_indices = @transform_3, window_bounds = array<i64: 1, 8, 128>}]} {
    %c0_i32 = arith.constant 0 : i32
    %0 = arith.cmpi eq, %arg2, %c0_i32 : i32
    %1 = arith.extui %0 : i1 to i32
    %c0_i32_0 = arith.constant 0 : i32
    %2 = arith.cmpi ne, %1, %c0_i32_0 : i32
    scf.if %2 {
      %cst_18 = arith.constant 0.000000e+00 : f32
      %28 = vector.broadcast %cst_18 : f32 to vector<8x1xf32>
      %c0_19 = arith.constant 0 : index
      %c0_20 = arith.constant 0 : index
      %29 = vector.load %arg7[%c0_19, %c0_20] : memref<8x1xf32, #tpu.memory_space<vmem>>, vector<8x1xf32>
      tpu.vector_store %arg7[%c0_19, %c0_20], %28 {strides = array<i32>} : memref<8x1xf32, #tpu.memory_space<vmem>>, vector<8x1xf32>,
      %cst_21 = arith.constant 0.000000e+00 : f32
      %30 = vector.broadcast %cst_21 : f32 to vector<8x1xf32>
      %c0_22 = arith.constant 0 : index
      %c0_23 = arith.constant 0 : index
      %31 = vector.load %arg8[%c0_22, %c0_23] : memref<8x1xf32, #tpu.memory_space<vmem>>, vector<8x1xf32>
      tpu.vector_store %arg8[%c0_22, %c0_23], %30 {strides = array<i32>} : memref<8x1xf32, #tpu.memory_space<vmem>>, vector<8x1xf32>,
    } else {
    }
    %c0 = arith.constant 0 : index
    %c0_1 = arith.constant 0 : index
    %3 = vector.load %arg3[%c0, %c0_1] : memref<8x256xf32, #tpu.memory_space<vmem>>, vector<8x256xf32>
    %c0_2 = arith.constant 0 : index
    %c0_3 = arith.constant 0 : index
    %4 = vector.load %arg4[%c0_2, %c0_3] : memref<8x256xf32, #tpu.memory_space<vmem>>, vector<8x256xf32>
    %cst = arith.constant 0.000000e+00 : f32
    %5 = vector.broadcast %cst : f32 to vector<8x256xf32>
    %6 = arith.subf %5, %3 : vector<8x256xf32>
    %7 = math.exp %6 : vector<8x256xf32>
    %cst_4 = arith.constant 1.000000e+00 : f32
    %8 = vector.broadcast %cst_4 : f32 to vector<8x256xf32>
    %9 = arith.addf %8, %7 : vector<8x256xf32>
    %10 = tpu.reciprocal %9 : vector<8x256xf32> -> vector<8x256xf32>
    %c0_5 = arith.constant 0 : index
    %c0_6 = arith.constant 0 : index
    %11 = vector.load %arg7[%c0_5, %c0_6] : memref<8x1xf32, #tpu.memory_space<vmem>>, vector<8x1xf32>
    %12 = arith.mulf %10, %4 : vector<8x256xf32>
    %cst_7 = arith.constant dense<0.000000e+00> : vector<8xf32>
    %13 = vector.multi_reduction <add>, %12, %cst_7 [1] : vector<8x256xf32> to vector<8xf32>
    %14 = vector.shape_cast %13 : vector<8xf32> to vector<8x1xf32>
    %15 = arith.addf %11, %14 : vector<8x1xf32>
    %c0_8 = arith.constant 0 : index
    %c0_9 = arith.constant 0 : index
    %16 = vector.load %arg7[%c0_8, %c0_9] : memref<8x1xf32, #tpu.memory_space<vmem>>, vector<8x1xf32>
    tpu.vector_store %arg7[%c0_8, %c0_9], %15 {strides = array<i32>} : memref<8x1xf32, #tpu.memory_space<vmem>>, vector<8x1xf32>,
    %c0_10 = arith.constant 0 : index
    %c0_11 = arith.constant 0 : index
    %17 = vector.load %arg8[%c0_10, %c0_11] : memref<8x1xf32, #tpu.memory_space<vmem>>, vector<8x1xf32>
    %cst_12 = arith.constant dense<0.000000e+00> : vector<8xf32>
    %18 = vector.multi_reduction <add>, %10, %cst_12 [1] : vector<8x256xf32> to vector<8xf32>
    %19 = vector.shape_cast %18 : vector<8xf32> to vector<8x1xf32>
    %cst_13 = arith.constant dense<0.000000e+00> : vector<8xf32>
    %20 = vector.multi_reduction <add>, %4, %cst_13 [1] : vector<8x256xf32> to vector<8xf32>
    %21 = vector.shape_cast %20 : vector<8xf32> to vector<8x1xf32>
    %22 = arith.addf %19, %21 : vector<8x1xf32>
    %23 = arith.addf %17, %22 : vector<8x1xf32>
    %c0_14 = arith.constant 0 : index
    %c0_15 = arith.constant 0 : index
    %24 = vector.load %arg8[%c0_14, %c0_15] : memref<8x1xf32, #tpu.memory_space<vmem>>, vector<8x1xf32>
    tpu.vector_store %arg8[%c0_14, %c0_15], %23 {strides = array<i32>} : memref<8x1xf32, #tpu.memory_space<vmem>>, vector<8x1xf32>,
    %c0_i32_16 = arith.constant 0 : i32
    %25 = arith.cmpi eq, %arg2, %c0_i32_16 : i32
    %26 = arith.extui %25 : i1 to i32
    %c0_i32_17 = arith.constant 0 : i32
    %27 = arith.cmpi ne, %26, %c0_i32_17 : i32
    scf.if %27 {
      %c0_18 = arith.constant 0 : index
      %c0_19 = arith.constant 0 : index
      %28 = vector.load %arg7[%c0_18, %c0_19] : memref<8x1xf32, #tpu.memory_space<vmem>>, vector<8x1xf32>
      %29 = vector.shape_cast %28 : vector<8x1xf32> to vector<1x8x1xf32>
      %30 = vector.broadcast %29 : vector<1x8x1xf32> to vector<1x8x128xf32>
      %c0_20 = arith.constant 0 : index
      %c0_21 = arith.constant 0 : index
      %c0_22 = arith.constant 0 : index
      %31 = vector.load %arg5[%c0_20, %c0_21, %c0_22] : memref<1x8x128xf32, #tpu.memory_space<vmem>>, vector<1x8x128xf32>
      tpu.vector_store %arg5[%c0_20, %c0_21, %c0_22], %30 {strides = array<i32>} : memref<1x8x128xf32, #tpu.memory_space<vmem>>, vector<1x8x128xf32>,
      %c0_23 = arith.constant 0 : index
      %c0_24 = arith.constant 0 : index
      %32 = vector.load %arg8[%c0_23, %c0_24] : memref<8x1xf32, #tpu.memory_space<vmem>>, vector<8x1xf32>
      %33 = vector.shape_cast %32 : vector<8x1xf32> to vector<1x8x1xf32>
      %34 = vector.broadcast %33 : vector<1x8x1xf32> to vector<1x8x128xf32>
      %c0_25 = arith.constant 0 : index
      %c0_26 = arith.constant 0 : index
      %c0_27 = arith.constant 0 : index
      %35 = vector.load %arg6[%c0_25, %c0_26, %c0_27] : memref<1x8x128xf32, #tpu.memory_space<vmem>>, vector<1x8x128xf32>
      tpu.vector_store %arg6[%c0_25, %c0_26, %c0_27], %34 {strides = array<i32>} : memref<1x8x128xf32, #tpu.memory_space<vmem>>, vector<1x8x128xf32>,
    } else {
    }
    return
  }
  func.func @transform_0(%arg0: i32, %arg1: i32, %arg2: i32) -> (i32, i32) {
    %c1_i32 = arith.constant 1 : i32
    %0 = arith.muli %arg0, %c1_i32 : i32
    %1 = arith.addi %0, %arg2 : i32
    %c0_i32 = arith.constant 0 : i32
    %2 = arith.minsi %1, %c0_i32 : i32
    %c0_i32_0 = arith.constant 0 : i32
    return %arg1, %2 : i32, i32
  }
  func.func @transform_1(%arg0: i32, %arg1: i32, %arg2: i32) -> (i32, i32) {
    %c1_i32 = arith.constant 1 : i32
    %0 = arith.muli %arg0, %c1_i32 : i32
    %1 = arith.addi %0, %arg2 : i32
    %c0_i32 = arith.constant 0 : i32
    %2 = arith.minsi %1, %c0_i32 : i32
    %c0_i32_0 = arith.constant 0 : i32
    return %arg1, %2 : i32, i32
  }
  func.func @transform_2(%arg0: i32, %arg1: i32, %arg2: i32) -> (i32, i32, i32) {
    %c0_i32 = arith.constant 0 : i32
    %c0_i32_0 = arith.constant 0 : i32
    return %arg0, %arg1, %c0_i32 : i32, i32, i32
  }
  func.func @transform_3(%arg0: i32, %arg1: i32, %arg2: i32) -> (i32, i32, i32) {
    %c0_i32 = arith.constant 0 : i32
    %c0_i32_0 = arith.constant 0 : i32
    return %arg0, %arg1, %c0_i32 : i32, i32, i32
  }
}

</mosaic_0001>

<llo_original>
// kernel: tpu_custom_call.1
$region0: #{tpu_custom_call.1}
  #allocation0 [shape = 'u32[]', space=smem, size = 0x4, offset = 0x4, fixed_abs, tag = 'smem constant byte address 0x4 - core index']
  #allocation1 [shape = 'u32[72,128]{1,0:T(1,128)}', space=vmem, size = 0x9000, scoped, tag = 'internal scratch']
  #allocation2 [shape = 'f32[8,1]{1,0:T(8,128)}', space=vmem, size = 0x1000, scoped, tag = 'scratch operand']
  #allocation3 [shape = 'f32[8,1]{1,0:T(8,128)}', space=vmem, size = 0x1000, scoped, tag = 'scratch operand']
  %s0 = inlined_call_operand.hbm [shape: f32[2,256], index: 0, kind: input, shape index: {}]
  %s1 = inlined_call_operand.hbm [shape: f32[2,256], index: 1, kind: input, shape index: {}]
  %s2 = inlined_call_operand.hbm [shape: f32[1,2,128], index: 2, kind: output, shape index: {0}]
  %s3 = inlined_call_operand.hbm [shape: f32[1,2,128], index: 3, kind: output, shape index: {1}]
  %4 = xla_tuple %s2, %s3
  %s5 = sld [smem:[#allocation0]]
  $region42: #{tpu_custom_call.1} parent=0
    _
  %s7 = ssub.s32 1, %s5
  %s8 = scalar_select 0, %s7, %s5
  $region1: #{tpu_custom_call.1} parent=0
    #allocation4 [shape = 'u8[8192]{0}', space=vmem, size = 0x2000, scoped, tag = 'input window, operand 0, single buffered']
    #allocation5 [shape = 's32[1]{0}', space=sflag, size = 0x4, scoped, tag = 'scoped memory for tpu_custom_call.1']
    #allocation6 [shape = 's32[1]{0}', space=sflag, size = 0x4, scoped, tag = 'scoped memory for tpu_custom_call.1']
    #allocation7 [shape = 'u8[8192]{0}', space=vmem, size = 0x2000, scoped, tag = 'input window, operand 1, single buffered']
    #allocation8 [shape = 's32[1]{0}', space=sflag, size = 0x4, scoped, tag = 'scoped memory for tpu_custom_call.1']
    #allocation9 [shape = 'u8[4096]{0}', space=vmem, size = 0x1000, scoped, tag = 'output window, operand 0, single buffered']
    #allocation10 [shape = 'u8[4096]{0}', space=vmem, size = 0x1000, scoped, tag = 'output window, operand 1, single buffered']
    #allocation11 [shape = 's32[1]{0}', space=sflag, size = 0x4, scoped, tag = 'scoped memory for tpu_custom_call.1']
    %9 = vsyncpa [#allocation5], 0
    %10 = vsyncpa [#allocation8], 0
    %11 = vsyncpa [#allocation6], 0
    %12 = vsyncpa [#allocation11], 0
    // Predicated region
    $region2: #{tpu_custom_call.1} parent=1 // pred_check
      _
    $region3: #{tpu_custom_call.1} parent=1 // pred_check_branch
      %14 = sbr.rel (0) target = $region5
    $region4: #{tpu_custom_call.1} parent=1 // pred_region
      %s15 = sadd.s32 0, 0
      %p16 = scmp.lt.s32.totalorder %s15, 0
      %s17 = scalar_select %p16, %s15, 0
      %s18 = smul.u32 2, %s17
      %20 = vsyncadd [#allocation5], 192
      %s21 = smul.addr %s18, 2
      %s22 = scalar_lea.hbm %s0, %s21
      %s23 = sshll.u32 %s22, 4
      %s24 = int_to_ptr.hbm [resolvable:$true] %s23
      %s25 = sshll.u32 [#allocation4], 4
      %s26 = int_to_ptr.vmem [resolvable:$true] %s25
      %31 = dma.hbm_to_vmem [thread:$0]  %s24, 64, %s26, [#allocation5], 64, 64, 4
    $region5: #{tpu_custom_call.1} parent=1 // pred_fallthru
      _
    // Predicated region
    $region6: #{tpu_custom_call.1} parent=1 // pred_check
      _
    $region7: #{tpu_custom_call.1} parent=1 // pred_check_branch
      %33 = sbr.rel (0) target = $region9
    $region8: #{tpu_custom_call.1} parent=1 // pred_region
      %s34 = sadd.s32 0, 0
      %p35 = scmp.lt.s32.totalorder %s34, 0
      %s36 = scalar_select %p35, %s34, 0
      %s37 = smul.u32 2, %s36
      %39 = vsyncadd [#allocation8], 192
      %s40 = smul.addr %s37, 2
      %s41 = scalar_lea.hbm %s1, %s40
      %s42 = sshll.u32 %s41, 4
      %s43 = int_to_ptr.hbm [resolvable:$true] %s42
      %s44 = sshll.u32 [#allocation7], 4
      %s45 = int_to_ptr.vmem [resolvable:$true] %s44
      %50 = dma.hbm_to_vmem [thread:$0]  %s43, 64, %s45, [#allocation8], 64, 64, 4
    $region9: #{tpu_custom_call.1} parent=1 // pred_fallthru
      _
    // Predicated region
    $region10: #{tpu_custom_call.1} parent=1 // pred_check
      _
    $region11: #{tpu_custom_call.1} parent=1 // pred_check_branch
      %52 = sbr.rel (0) target = $region13
    $region12: #{tpu_custom_call.1} parent=1 // pred_region
      %54 = dma.done [#allocation5], 256
    $region13: #{tpu_custom_call.1} parent=1 // pred_fallthru
      _
    // Predicated region
    $region14: #{tpu_custom_call.1} parent=1 // pred_check
      _
    $region15: #{tpu_custom_call.1} parent=1 // pred_check_branch
      %56 = sbr.rel (0) target = $region17
    $region16: #{tpu_custom_call.1} parent=1 // pred_region
      %58 = dma.done [#allocation8], 256
    $region17: #{tpu_custom_call.1} parent=1 // pred_fallthru
      _
    %s59 = sadd.s32 0, 0
    %p60 = scmp.lt.s32.totalorder %s59, 0
    %s61 = scalar_select %p60, %s59, 0
    %s62 = smul.u32 2, %s61
    %s63 = sadd.s32 0, 0
    %p64 = scmp.lt.s32.totalorder %s63, 0
    %s65 = scalar_select %p64, %s63, 0
    %s66 = smul.u32 2, %s65
    %p67 = scmp.eq.s32.totalorder 0, 0
    // Predicated region
    $region18: #{tpu_custom_call.1} parent=1 // pred_check
      %p68 = pneg %p67
    $region19: #{tpu_custom_call.1} parent=1 // pred_check_branch
      %70 = sbr.rel (%p68) target = $region21
    $region20: #{tpu_custom_call.1} parent=1 // pred_region
      %vm71 = vcmask 7168
      %72 = vst.msk [vmem:[#allocation2] sm:$0xff] %vm71, 0.0
      %73 = vst.msk [vmem:[#allocation3] sm:$0xff] %vm71, 0.0
    $region21: #{tpu_custom_call.1} parent=1 // pred_fallthru
      _
    %v74 = vld [vmem:[#allocation4] sm:$0xf]
    %v75 = vld [vmem:[#allocation4 + $0x4] sm:$0xf]
    %v76 = vld [vmem:[#allocation4 + $0x8] sm:$0xf]
    %v77 = vld [vmem:[#allocation4 + $0xc] sm:$0xf]
    %v78 = vld [vmem:[#allocation7] sm:$0xf]
    %v79 = vld [vmem:[#allocation7 + $0x4] sm:$0xf]
    %v80 = vld [vmem:[#allocation7 + $0x8] sm:$0xf]
    %v81 = vld [vmem:[#allocation7 + $0xc] sm:$0xf]
    %v82 = vsub.f32 0.0, %v74
    %v83 = vsub.f32 0.0, %v75
    %v84 = vsub.f32 0.0, %v76
    %v85 = vsub.f32 0.0, %v77
    %v86 = vmul.f32 %v82, 1.442695
    %v87 = vpow.pop %v86
    %v88 = vmul.f32 %v83, 1.442695
    %v89 = vpow.pop %v88
    %v90 = vmul.f32 %v84, 1.442695
    %v91 = vpow.pop %v90
    %v92 = vmul.f32 %v85, 1.442695
    %v93 = vpow.pop %v92
    %v94 = vadd.f32 %v87, 1.0
    %v95 = vadd.f32 %v89, 1.0
    %v96 = vadd.f32 %v91, 1.0
    %v97 = vadd.f32 %v93, 1.0
    %v98 = vrcp.pop %v94
    %v99 = vmul.f32 %v94, %v98
    %v100 = vsub.f32 1.0, %v99
    %v101 = vmul.f32 %v98, %v100
    %v102 = vadd.f32 %v98, %v101
    %vm103 = vweird.f32 %v94
    %vm104 = vweird.f32 %v98
    %vm105 = vmor %vm103, %vm104
    %v106 = vsel %vm105, %v98, %v102
    %v107 = vand.u32 2147483647, %v94
    %vm108 = vcmp.eq.f32.partialorder %v107, 8.507059e+37
    %v109 = vand.u32 %v94, 2147483648
    %v110 = vor.u32 1.1754944e-38, %v109
    %v111 = vsel %vm108, %v110, %v106
    %v112 = vrcp.pop %v95
    %v113 = vmul.f32 %v95, %v112
    %v114 = vsub.f32 1.0, %v113
    %v115 = vmul.f32 %v112, %v114
    %v116 = vadd.f32 %v112, %v115
    %vm117 = vweird.f32 %v95
    %vm118 = vweird.f32 %v112
    %vm119 = vmor %vm117, %vm118
    %v120 = vsel %vm119, %v112, %v116
    %v121 = vand.u32 2147483647, %v95
    %vm122 = vcmp.eq.f32.partialorder %v121, 8.507059e+37
    %v123 = vand.u32 %v95, 2147483648
    %v124 = vor.u32 1.1754944e-38, %v123
    %v125 = vsel %vm122, %v124, %v120
    %v126 = vrcp.pop %v96
    %v127 = vmul.f32 %v96, %v126
    %v128 = vsub.f32 1.0, %v127
    %v129 = vmul.f32 %v126, %v128
    %v130 = vadd.f32 %v126, %v129
    %vm131 = vweird.f32 %v96
    %vm132 = vweird.f32 %v126
    %vm133 = vmor %vm131, %vm132
    %v134 = vsel %vm133, %v126, %v130
    %v135 = vand.u32 2147483647, %v96
    %vm136 = vcmp.eq.f32.partialorder %v135, 8.507059e+37
    %v137 = vand.u32 %v96, 2147483648
    %v138 = vor.u32 1.1754944e-38, %v137
    %v139 = vsel %vm136, %v138, %v134
    %v140 = vrcp.pop %v97
    %v141 = vmul.f32 %v97, %v140
    %v142 = vsub.f32 1.0, %v141
    %v143 = vmul.f32 %v140, %v142
    %v144 = vadd.f32 %v140, %v143
    %vm145 = vweird.f32 %v97
    %vm146 = vweird.f32 %v140
    %vm147 = vmor %vm145, %vm146
    %v148 = vsel %vm147, %v140, %v144
    %v149 = vand.u32 2147483647, %v97
    %vm150 = vcmp.eq.f32.partialorder %v149, 8.507059e+37
    %v151 = vand.u32 %v97, 2147483648
    %v152 = vor.u32 1.1754944e-38, %v151
    %v153 = vsel %vm150, %v152, %v148
    %v154 = vld [vmem:[#allocation2] sm:$0xff]
    %v155 = vmul.f32 %v111, %v78
    %v156 = vmul.f32 %v125, %v79
    %v157 = vmul.f32 %v139, %v80
    %v158 = vmul.f32 %v153, %v81
    %163 = vst [vmem:[#allocation1] ss:$4 sm:$0xff] %v155
    %s164 = scalar_lea.vmem [#allocation1], 1
    %165 = vst [vmem:[%s164] ss:$4 sm:$0xff] %v156
    %s166 = scalar_lea.vmem [#allocation1], 2
    %167 = vst [vmem:[%s166] ss:$4 sm:$0xff] %v157
    %s168 = scalar_lea.vmem [#allocation1], 3
    %169 = vst [vmem:[%s168] ss:$4 sm:$0xff] %v158
    %v170 = vld.sshfl [vmem:[#allocation1] sm:$0xff pattern:$0x73625140]
    %v171 = vld.sshfl [vmem:[#allocation1 + $0x8] sm:$0xff pattern:$0x73625140]
    %v174 = vadd.f32 %v170, %v171
    %175 = vadd.xlane.f32.xlu0 %v174
    %v176 = vpop.xlane.xlu0 %175
    %v177 = vadd.f32 %v154, %v176
    %vm178 = vcmask 7168
    %179 = vst.msk [vmem:[#allocation2] sm:$0xff] %vm178, %v177
    %v180 = vld [vmem:[#allocation3] sm:$0xff]
    %185 = vst [vmem:[#allocation1] ss:$4 sm:$0xff] %v111
    %s186 = scalar_lea.vmem [#allocation1], 1
    %187 = vst [vmem:[%s186] ss:$4 sm:$0xff] %v125
    %s188 = scalar_lea.vmem [#allocation1], 2
    %189 = vst [vmem:[%s188] ss:$4 sm:$0xff] %v139
    %s190 = scalar_lea.vmem [#allocation1], 3
    %191 = vst [vmem:[%s190] ss:$4 sm:$0xff] %v153
    %v192 = vld.sshfl [vmem:[#allocation1] sm:$0xff pattern:$0x73625140]
    %v193 = vld.sshfl [vmem:[#allocation1 + $0x8] sm:$0xff pattern:$0x73625140]
    %v196 = vadd.f32 %v192, %v193
    %197 = vadd.xlane.f32.xlu0 %v196
    %v198 = vpop.xlane.xlu0 %197
    %203 = vst [vmem:[#allocation1] ss:$4 sm:$0xff] %v78
    %s204 = scalar_lea.vmem [#allocation1], 1
    %205 = vst [vmem:[%s204] ss:$4 sm:$0xff] %v79
    %s206 = scalar_lea.vmem [#allocation1], 2
    %207 = vst [vmem:[%s206] ss:$4 sm:$0xff] %v80
    %s208 = scalar_lea.vmem [#allocation1], 3
    %209 = vst [vmem:[%s208] ss:$4 sm:$0xff] %v81
    %v210 = vld.sshfl [vmem:[#allocation1] sm:$0xff pattern:$0x73625140]
    %v211 = vld.sshfl [vmem:[#allocation1 + $0x8] sm:$0xff pattern:$0x73625140]
    %v214 = vadd.f32 %v210, %v211
    %215 = vadd.xlane.f32.xlu0 %v214
    %v216 = vpop.xlane.xlu0 %215
    %v217 = vadd.f32 %v198, %v216
    %v218 = vadd.f32 %v180, %v217
    %219 = vst.msk [vmem:[#allocation3] sm:$0xff] %vm178, %v218
    // Predicated region
    $region22: #{tpu_custom_call.1} parent=1 // pred_check
      %p220 = pneg %p67
    $region23: #{tpu_custom_call.1} parent=1 // pred_check_branch
      %222 = sbr.rel (%p220) target = $region25
    $region24: #{tpu_custom_call.1} parent=1 // pred_region
      %v223 = vld [vmem:[#allocation2] sm:$0xff]
      %225 = vset.pattern.permute.xlu0 0
      %226 = vperm.xlu0 %225, %v223
      %v227 = vpop.permute.xlu0 %226
      %229 = vst [vmem:[#allocation9] sm:$0xff] %v227
      %v230 = vld [vmem:[#allocation3] sm:$0xff]
      %232 = vset.pattern.permute.xlu0 0
      %233 = vperm.xlu0 %232, %v230
      %v234 = vpop.permute.xlu0 %233
      %236 = vst [vmem:[#allocation10] sm:$0xff] %v234
    $region25: #{tpu_custom_call.1} parent=1 // pred_fallthru
      _
    // Predicated region
    $region26: #{tpu_custom_call.1} parent=1 // pred_check
      _
    $region27: #{tpu_custom_call.1} parent=1 // pred_check_branch
      %238 = sbr.rel (0) target = $region29
    $region28: #{tpu_custom_call.1} parent=1 // pred_region
      %240 = vsyncadd [#allocation6], 96
      %s241 = sshll.u32 [#allocation9], 4
      %s242 = int_to_ptr.vmem [resolvable:$true] %s241
      %s243 = sshll.u32 %s2, 4
      %s244 = int_to_ptr.hbm [resolvable:$true] %s243
      %249 = dma.vmem_to_hbm [thread:$0]  %s242, 32, %s244, [#allocation6], 32, 32, 2
    $region29: #{tpu_custom_call.1} parent=1 // pred_fallthru
      _
    // Predicated region
    $region30: #{tpu_custom_call.1} parent=1 // pred_check
      _
    $region31: #{tpu_custom_call.1} parent=1 // pred_check_branch
      %251 = sbr.rel (0) target = $region33
    $region32: #{tpu_custom_call.1} parent=1 // pred_region
      %253 = vsyncadd [#allocation11], 96
      %s254 = sshll.u32 [#allocation10], 4
      %s255 = int_to_ptr.vmem [resolvable:$true] %s254
      %s256 = sshll.u32 %s3, 4
      %s257 = int_to_ptr.hbm [resolvable:$true] %s256
      %262 = dma.vmem_to_hbm [thread:$0]  %s255, 32, %s257, [#allocation11], 32, 32, 2
    $region33: #{tpu_custom_call.1} parent=1 // pred_fallthru
      _
    // Predicated region
    $region34: #{tpu_custom_call.1} parent=1 // pred_check
      _
    $region35: #{tpu_custom_call.1} parent=1 // pred_check_branch
      %264 = sbr.rel (0) target = $region37
    $region36: #{tpu_custom_call.1} parent=1 // pred_region
      %266 = dma.done [#allocation6], 128
    $region37: #{tpu_custom_call.1} parent=1 // pred_fallthru
      _
    // Predicated region
    $region38: #{tpu_custom_call.1} parent=1 // pred_check
      _
    $region39: #{tpu_custom_call.1} parent=1 // pred_check_branch
      %268 = sbr.rel (0) target = $region41
    $region40: #{tpu_custom_call.1} parent=1 // pred_region
      %270 = dma.done [#allocation11], 128
    $region41: #{tpu_custom_call.1} parent=1 // pred_fallthru
      _
    %271 = vsyncpa [#allocation5], 1
    %272 = vsyncpa [#allocation8], 1
    %273 = vsyncpa [#allocation6], 1
    %274 = vsyncpa [#allocation11], 1

</llo_original>
